<compile_context>
chip_gen: v6e
topology: v6e:2x2x1
jax: 0.10.0
libtpu: 0.0.40
codegen_flags: <defaults>
</compile_context>

<pallas_src>
import jax
import jax.numpy as jnp
from jax.experimental import pallas as pl
from jax.experimental.pallas import tpu as pltpu

BN_EPS = 1e-5


def _round_up(n, m):
    return ((n + m - 1) // m) * m


def _pick_tile(dim):
    # dim is a multiple of 128 after padding; prefer larger lane-dense tiles.
    for cand in (512, 256, 128):
        if dim % cand == 0:
            return cand
    return dim


def _swish_f32(x):
    # x * sigmoid(x); reciprocal goes to the EUP slot (overlaps VALU/XLU work).
    return x * pl.reciprocal(1.0 + jnp.exp(-x))


def _bn_affine_f32(t, gamma, beta):
    """Training-mode BatchNorm over axis 0 (biased variance), folded scale/shift."""
    inv_b = 1.0 / t.shape[0]
    mu = jnp.sum(t, axis=0, keepdims=True) * inv_b
    m2 = jnp.sum(t * t, axis=0, keepdims=True) * inv_b
    var = jnp.maximum(m2 - mu * mu, 0.0)
    scale = gamma * jax.lax.rsqrt(var + BN_EPS)
    shift = beta - mu * scale
    return t * scale + shift


def _fc_bn_swish_kernel(x_ref, w_ref, g_ref, be_ref, o_ref):
    t = jnp.dot(x_ref[...].astype(jnp.float32), w_ref[...],
                preferred_element_type=jnp.float32)
    h = _bn_affine_f32(t, g_ref[...], be_ref[...])
    o_ref[...] = _swish_f32(h).astype(o_ref.dtype)


def _fc_bn_res_swish_kernel(x_ref, w_ref, g_ref, be_ref, res_ref, o_ref):
    t = jnp.dot(x_ref[...].astype(jnp.float32), w_ref[...],
                preferred_element_type=jnp.float32)
    y = _bn_affine_f32(t, g_ref[...], be_ref[...])
    y = y + res_ref[...].astype(jnp.float32)
    o_ref[...] = _swish_f32(y).astype(o_ref.dtype)


def _fc_bn_act(x, w, gamma, beta, residual=None):
    """swish(BN(x @ w) [+ residual]); grid over lane-dense output-column tiles."""
    B, K = x.shape
    Kw, N = w.shape
    assert K == Kw and N % 128 == 0
    tn = _pick_tile(N)
    grid = (N // tn,)

    in_specs = [
        pl.BlockSpec((B, K), lambda j: (0, 0)),    # activations: resident across grid
        pl.BlockSpec((K, tn), lambda j: (0, j)),   # weight tile: streamed/double-buffered
        pl.BlockSpec((1, tn), lambda j: (0, j)),   # gamma tile
        pl.BlockSpec((1, tn), lambda j: (0, j)),   # beta tile
    ]
    args = [x, w, gamma, beta]
    if residual is None:
        kernel = _fc_bn_swish_kernel
    else:
        in_specs.append(pl.BlockSpec((B, tn), lambda j: (0, j)))   # residual tile
        args.append(residual)
        kernel = _fc_bn_res_swish_kernel

    cost = pl.CostEstimate(
        flops=2 * B * K * N + 10 * B * N,
        transcendentals=B * N,
        bytes_accessed=4 * (B * K + K * N + 2 * N + 2 * B * N),
    )

    # Resident activations + double-buffered weight / output / residual tiles.
    tile_bytes = 4 * (B * K + 2 * K * tn + 2 * B * tn + 4 * tn
                      + (2 * B * tn if residual is not None else 0))
    vmem_limit = int(min(max(2 * tile_bytes, 32 * 1024 * 1024), 64 * 1024 * 1024))

    return pl.pallas_call(
        kernel,
        out_shape=jax.ShapeDtypeStruct((B, N), x.dtype),
        grid=grid,
        in_specs=in_specs,
        out_specs=pl.BlockSpec((B, tn), lambda j: (0, j)),
        compiler_params=pltpu.CompilerParams(
            dimension_semantics=("parallel",),
            vmem_limit_bytes=vmem_limit,
        ),
        cost_estimate=cost,
    )(*args)


def block5_forward(x, params):
    """x: (B, F) float32.  params: w1,b1,g1,be1,w2,b2,g2,be2 (torch-equivalent init)."""
    B, F = x.shape
    H = 3 * F
    Fp = _round_up(F, 128)
    Hp = _round_up(H, 128)

    def pad2(a, rows, cols):
        return jnp.pad(a, ((0, rows - a.shape[0]), (0, cols - a.shape[1])))

    xp = pad2(x, B, Fp)
    w1p = pad2(params["w1"], Fp, Hp)
    g1p = pad2(params["g1"], 1, Hp)
    be1p = pad2(params["be1"], 1, Hp)
    w2p = pad2(params["w2"], Hp, Fp)
    g2p = pad2(params["g2"], 1, Fp)
    be2p = pad2(params["be2"], 1, Fp)

    # fc biases (b1, b2) are NOT passed: training-mode BN subtracts the batch
    # mean per column, which cancels any per-column bias exactly.
    h = _fc_bn_act(xp, w1p, g1p, be1p)                 # (B, Hp): fc1 -> bn1 -> swish
    y = _fc_bn_act(h, w2p, g2p, be2p, residual=xp)     # (B, Fp): fc2 -> bn2 -> +x -> swish
    return y[:, :F]


def init_params(key, in_shape):
    """Deterministic synthetic parameters matching block5(in_shape)."""
    F, H = in_shape, in_shape * 3
    ks = jax.random.split(key, 4)
    bound1 = 1.0 / jnp.sqrt(F)
    bound2 = 1.0 / jnp.sqrt(H)
    return {
        # Linear weights stored as (in, out) = transpose of torch's (out, in)
        "w1": jax.random.uniform(ks[0], (F, H), jnp.float32, -bound1, bound1),
        "b1": jax.random.uniform(ks[1], (1, H), jnp.float32, -bound1, bound1),
        "g1": jnp.ones((1, H), jnp.float32),     # BatchNorm1d weight init
        "be1": jnp.zeros((1, H), jnp.float32),   # BatchNorm1d bias init
        "w2": jax.random.uniform(ks[2], (H, F), jnp.float32, -bound2, bound2),
        "b2": jax.random.uniform(ks[3], (1, F), jnp.float32, -bound2, bound2),
        "g2": jnp.ones((1, F), jnp.float32),
        "be2": jnp.zeros((1, F), jnp.float32),
    }


def _reference(x, p):
    """Plain-JAX reference (includes the fc biases; BN cancels them)."""
    h = x @ p["w1"] + p["b1"]
    mu = h.mean(0, keepdims=True)
    var = ((h - mu) ** 2).mean(0, keepdims=True)
    h = (h - mu) / jnp.sqrt(var + BN_EPS) * p["g1"] + p["be1"]
    h = h * jax.nn.sigmoid(h)
    y = h @ p["w2"] + p["b2"]
    mu2 = y.mean(0, keepdims=True)
    var2 = ((y - mu2) ** 2).mean(0, keepdims=True)
    y = (y - mu2) / jnp.sqrt(var2 + BN_EPS) * p["g2"] + p["be2"]
    y = y + x
    return y * jax.nn.sigmoid(y)


if __name__ == "__main__":
    key = jax.random.PRNGKey(0)
    k_x, k_p = jax.random.split(key)

    B, F = 8, 32                      # batch=8, in_shape=32
    x = jax.random.normal(k_x, (B, F), jnp.float32)
    params = init_params(k_p, F)

    out = jax.block_until_ready(block5_forward(x, params))
    ref = _reference(x, params)

    assert out.shape == (B, F)
    assert jnp.allclose(out, ref, atol=1e-4, rtol=1e-4), "mismatch vs reference"

    print("KERNEL_OK")
</pallas_src>

<mosaic_0001>
module attributes {stable_mosaic.version = 11 : i64} {
  func.func @_fc_bn_swish_kernel(%arg0: i32, %arg1: memref<8x128xf32, #tpu.memory_space<vmem>>, %arg2: memref<128x128xf32, #tpu.memory_space<vmem>>, %arg3: memref<1x128xf32, #tpu.memory_space<vmem>>, %arg4: memref<1x128xf32, #tpu.memory_space<vmem>>, %arg5: memref<8x128xf32, #tpu.memory_space<vmem>>) attributes {dimension_semantics = [#tpu.dimension_semantics<parallel>], iteration_bounds = array<i64: 1>, scalar_prefetch = 0 : i64, scratch_operands = 0 : i64, tpu.core_type = #tpu.core_type<tc>, window_params = [{pipeline_mode = #tpu.pipeline_mode<synchronous>, transform_indices = @transform_0, window_bounds = array<i64: 8, 128>}, {transform_indices = @transform_1, window_bounds = array<i64: 128, 128>}, {transform_indices = @transform_2, window_bounds = array<i64: 1, 128>}, {transform_indices = @transform_3, window_bounds = array<i64: 1, 128>}, {transform_indices = @transform_4, window_bounds = array<i64: 8, 128>}]} {
    %c0 = arith.constant 0 : index
    %c0_0 = arith.constant 0 : index
    %0 = vector.load %arg1[%c0, %c0_0] : memref<8x128xf32, #tpu.memory_space<vmem>>, vector<8x128xf32>
    %c0_1 = arith.constant 0 : index
    %c0_2 = arith.constant 0 : index
    %1 = vector.load %arg2[%c0_1, %c0_2] : memref<128x128xf32, #tpu.memory_space<vmem>>, vector<128x128xf32>
    %cst = arith.constant dense<0.000000e+00> : vector<8x128xf32>
    %2 = tpu.matmul %0, %1, %cst {dimension_numbers = #tpu.dot_dimension_numbers<[1], [0], [0], [1], [0, 0, 1, 1], [], []>} : vector<8x128xf32>, vector<128x128xf32>, vector<8x128xf32> -> vector<8x128xf32>
    %c0_3 = arith.constant 0 : index
    %c0_4 = arith.constant 0 : index
    %3 = vector.load %arg3[%c0_3, %c0_4] : memref<1x128xf32, #tpu.memory_space<vmem>>, vector<1x128xf32>
    %c0_5 = arith.constant 0 : index
    %c0_6 = arith.constant 0 : index
    %4 = vector.load %arg4[%c0_5, %c0_6] : memref<1x128xf32, #tpu.memory_space<vmem>>, vector<1x128xf32>
    %cst_7 = arith.constant dense<0.000000e+00> : vector<128xf32>
    %5 = vector.multi_reduction <add>, %2, %cst_7 [0] : vector<8x128xf32> to vector<128xf32>
    %6 = vector.shape_cast %5 : vector<128xf32> to vector<1x128xf32>
    %cst_8 = arith.constant 1.250000e-01 : f32
    %7 = vector.broadcast %cst_8 : f32 to vector<1x128xf32>
    %8 = arith.mulf %6, %7 : vector<1x128xf32>
    %9 = arith.mulf %2, %2 : vector<8x128xf32>
    %cst_9 = arith.constant dense<0.000000e+00> : vector<128xf32>
    %10 = vector.multi_reduction <add>, %9, %cst_9 [0] : vector<8x128xf32> to vector<128xf32>
    %11 = vector.shape_cast %10 : vector<128xf32> to vector<1x128xf32>
    %cst_10 = arith.constant 1.250000e-01 : f32
    %12 = vector.broadcast %cst_10 : f32 to vector<1x128xf32>
    %13 = arith.mulf %11, %12 : vector<1x128xf32>
    %14 = arith.mulf %8, %8 : vector<1x128xf32>
    %15 = arith.subf %13, %14 : vector<1x128xf32>
    %cst_11 = arith.constant 0.000000e+00 : f32
    %16 = vector.broadcast %cst_11 : f32 to vector<1x128xf32>
    %17 = arith.maximumf %15, %16 : vector<1x128xf32>
    %cst_12 = arith.constant 9.99999974E-6 : f32
    %18 = vector.broadcast %cst_12 : f32 to vector<1x128xf32>
    %19 = arith.addf %17, %18 : vector<1x128xf32>
    %20 = math.rsqrt %19 : vector<1x128xf32>
    %21 = arith.mulf %3, %20 : vector<1x128xf32>
    %22 = arith.mulf %8, %21 : vector<1x128xf32>
    %23 = arith.subf %4, %22 : vector<1x128xf32>
    %24 = vector.broadcast %21 : vector<1x128xf32> to vector<8x128xf32>
    %25 = arith.mulf %2, %24 : vector<8x128xf32>
    %26 = vector.broadcast %23 : vector<1x128xf32> to vector<8x128xf32>
    %27 = arith.addf %25, %26 : vector<8x128xf32>
    %cst_13 = arith.constant 0.000000e+00 : f32
    %28 = vector.broadcast %cst_13 : f32 to vector<8x128xf32>
    %29 = arith.subf %28, %27 : vector<8x128xf32>
    %30 = math.exp %29 : vector<8x128xf32>
    %cst_14 = arith.constant 1.000000e+00 : f32
    %31 = vector.broadcast %cst_14 : f32 to vector<8x128xf32>
    %32 = arith.addf %31, %30 : vector<8x128xf32>
    %33 = tpu.reciprocal %32 : vector<8x128xf32> -> vector<8x128xf32>
    %34 = arith.mulf %27, %33 : vector<8x128xf32>
    %c0_15 = arith.constant 0 : index
    %c0_16 = arith.constant 0 : index
    %35 = vector.load %arg5[%c0_15, %c0_16] : memref<8x128xf32, #tpu.memory_space<vmem>>, vector<8x128xf32>
    tpu.vector_store %arg5[%c0_15, %c0_16], %34 {strides = array<i32>} : memref<8x128xf32, #tpu.memory_space<vmem>>, vector<8x128xf32>,
    return
  }
  func.func @transform_0(%arg0: i32) -> (i32, i32) {
    %c0_i32 = arith.constant 0 : i32
    %c0_i32_0 = arith.constant 0 : i32
    %c0_i32_1 = arith.constant 0 : i32
    return %c0_i32, %c0_i32_0 : i32, i32
  }
  func.func @transform_1(%arg0: i32) -> (i32, i32) {
    %c0_i32 = arith.constant 0 : i32
    %c0_i32_0 = arith.constant 0 : i32
    return %c0_i32, %arg0 : i32, i32
  }
  func.func @transform_2(%arg0: i32) -> (i32, i32) {
    %c0_i32 = arith.constant 0 : i32
    %c0_i32_0 = arith.constant 0 : i32
    return %c0_i32, %arg0 : i32, i32
  }
  func.func @transform_3(%arg0: i32) -> (i32, i32) {
    %c0_i32 = arith.constant 0 : i32
    %c0_i32_0 = arith.constant 0 : i32
    return %c0_i32, %arg0 : i32, i32
  }
  func.func @transform_4(%arg0: i32) -> (i32, i32) {
    %c0_i32 = arith.constant 0 : i32
    %c0_i32_0 = arith.constant 0 : i32
    return %c0_i32, %arg0 : i32, i32
  }
}

</mosaic_0001>

<llo_original>
// kernel: tpu_custom_call.1
$region0: #{tpu_custom_call.1}
  #allocation0 [shape = 'u32[]', space=smem, size = 0x4, offset = 0x4, fixed_abs, tag = 'smem constant byte address 0x4 - core index']
  #allocation1 [shape = 'u32[144,128]{1,0:T(1,128)}', space=vmem, size = 0x12000, scoped, tag = 'internal scratch']
  %s0 = inlined_call_operand.hbm [shape: f32[8,128], index: 0, kind: input, shape index: {}]
  %s1 = inlined_call_operand.hbm [shape: f32[128,128], index: 1, kind: input, shape index: {}]
  %s2 = inlined_call_operand.vmem [shape: f32[1,128], index: 2, kind: input, shape index: {}]
  %s3 = inlined_call_operand.vmem [shape: f32[1,128], index: 3, kind: input, shape index: {}]
  %s4 = inlined_call_operand.hbm [shape: f32[8,128], index: 4, kind: output, shape index: {}]
  %s5 = sld [smem:[#allocation0]]
  $region34: #{tpu_custom_call.1} parent=0
    _
  %s7 = ssub.s32 1, %s5
  %s8 = scalar_select 0, %s7, %s5
  $region1: #{tpu_custom_call.1} parent=0
    #allocation2 [shape = 'u8[4096]{0}', space=vmem, size = 0x1000, scoped, tag = 'input window, operand 0, single buffered']
    #allocation3 [shape = 's32[1]{0}', space=sflag, size = 0x4, scoped, tag = 'scoped memory for tpu_custom_call.1']
    #allocation4 [shape = 's32[1]{0}', space=sflag, size = 0x4, scoped, tag = 'scoped memory for tpu_custom_call.1']
    #allocation5 [shape = 'u8[65536]{0}', space=vmem, size = 0x10000, scoped, tag = 'input window, operand 1, single buffered']
    #allocation6 [shape = 's32[1]{0}', space=sflag, size = 0x4, scoped, tag = 'scoped memory for tpu_custom_call.1']
    #allocation7 [shape = 'u8[4096]{0}', space=vmem, size = 0x1000, scoped, tag = 'output window, operand 0, single buffered']
    %9 = vsyncpa [#allocation3], 0
    %10 = vsyncpa [#allocation6], 0
    %11 = vsyncpa [#allocation4], 0
    // Predicated region
    $region2: #{tpu_custom_call.1} parent=1 // pred_check
      _
    $region3: #{tpu_custom_call.1} parent=1 // pred_check_branch
      %13 = sbr.rel (0) target = $region5
    $region4: #{tpu_custom_call.1} parent=1 // pred_region
      %s15 = ssub.s32 128, 128
      %16 = vsyncadd [#allocation3], %s15
      %s18 = sshll.u32 [#allocation2], 4
      %s19 = int_to_ptr.vmem [resolvable:$true] %s18
      %21 = dma.hbm_to_vmem [thread:$0]  %s0, 128, %s19, [#allocation3]
    $region5: #{tpu_custom_call.1} parent=1 // pred_fallthru
      _
    // Predicated region
    $region6: #{tpu_custom_call.1} parent=1 // pred_check
      _
    $region7: #{tpu_custom_call.1} parent=1 // pred_check_branch
      %23 = sbr.rel (0) target = $region9
    $region8: #{tpu_custom_call.1} parent=1 // pred_region
      %s25 = ssub.s32 2048, 2048
      %26 = vsyncadd [#allocation6], %s25
      %s27 = sshll.u32 [#allocation5], 4
      %s28 = int_to_ptr.vmem [resolvable:$true] %s27
      %33 = dma.hbm_to_vmem [thread:$0]  %s1, 2048, %s28, [#allocation6], 128, 128, 8
    $region9: #{tpu_custom_call.1} parent=1 // pred_fallthru
      _
    // Predicated region
    $region10: #{tpu_custom_call.1} parent=1 // pred_check
      _
    $region11: #{tpu_custom_call.1} parent=1 // pred_check_branch
      %35 = sbr.rel (0) target = $region13
    $region12: #{tpu_custom_call.1} parent=1 // pred_region
      _
    $region13: #{tpu_custom_call.1} parent=1 // pred_fallthru
      _
    // Predicated region
    $region14: #{tpu_custom_call.1} parent=1 // pred_check
      _
    $region15: #{tpu_custom_call.1} parent=1 // pred_check_branch
      %37 = sbr.rel (0) target = $region17
    $region16: #{tpu_custom_call.1} parent=1 // pred_region
      _
    $region17: #{tpu_custom_call.1} parent=1 // pred_fallthru
      _
    // Predicated region
    $region18: #{tpu_custom_call.1} parent=1 // pred_check
      _
    $region19: #{tpu_custom_call.1} parent=1 // pred_check_branch
      %39 = sbr.rel (0) target = $region21
    $region20: #{tpu_custom_call.1} parent=1 // pred_region
      %40 = dma.done [#allocation3], 128
    $region21: #{tpu_custom_call.1} parent=1 // pred_fallthru
      _
    // Predicated region
    $region22: #{tpu_custom_call.1} parent=1 // pred_check
      _
    $region23: #{tpu_custom_call.1} parent=1 // pred_check_branch
      %42 = sbr.rel (0) target = $region25
    $region24: #{tpu_custom_call.1} parent=1 // pred_region
      %43 = dma.done [#allocation6], 2048
    $region25: #{tpu_custom_call.1} parent=1 // pred_fallthru
      _
    %v44 = vld [vmem:[#allocation2] sm:$0xff]
    %v45 = vld [vmem:[#allocation5] sm:$0xff]
    %v46 = vld [vmem:[#allocation5 + $0x8] sm:$0xff]
    %v47 = vld [vmem:[#allocation5 + $0x10] sm:$0xff]
    %v48 = vld [vmem:[#allocation5 + $0x18] sm:$0xff]
    %v49 = vld [vmem:[#allocation5 + $0x20] sm:$0xff]
    %v50 = vld [vmem:[#allocation5 + $0x28] sm:$0xff]
    %v51 = vld [vmem:[#allocation5 + $0x30] sm:$0xff]
    %v52 = vld [vmem:[#allocation5 + $0x38] sm:$0xff]
    %v53 = vld [vmem:[#allocation5 + $0x40] sm:$0xff]
    %v54 = vld [vmem:[#allocation5 + $0x48] sm:$0xff]
    %v55 = vld [vmem:[#allocation5 + $0x50] sm:$0xff]
    %v56 = vld [vmem:[#allocation5 + $0x58] sm:$0xff]
    %v57 = vld [vmem:[#allocation5 + $0x60] sm:$0xff]
    %v58 = vld [vmem:[#allocation5 + $0x68] sm:$0xff]
    %v59 = vld [vmem:[#allocation5 + $0x70] sm:$0xff]
    %v60 = vld [vmem:[#allocation5 + $0x78] sm:$0xff]
    %61 = vmatprep.subr.mxu0 0.0
    %62 = vmatpush1.msra.mxu0 %v60
    %63 = vmatprep.subr.mxu0 0.0
    %64 = vmatpush1.msra.mxu0 %v59
    %65 = vmatprep.subr.mxu0 0.0
    %66 = vmatpush1.msra.mxu0 %v58
    %67 = vmatprep.subr.mxu0 0.0
    %68 = vmatpush1.msra.mxu0 %v57
    %69 = vmatprep.subr.mxu0 0.0
    %70 = vmatpush1.msra.mxu0 %v56
    %71 = vmatprep.subr.mxu0 0.0
    %72 = vmatpush1.msra.mxu0 %v55
    %73 = vmatprep.subr.mxu0 0.0
    %74 = vmatpush1.msra.mxu0 %v54
    %75 = vmatprep.subr.mxu0 0.0
    %76 = vmatpush1.msra.mxu0 %v53
    %77 = vmatprep.subr.mxu0 0.0
    %78 = vmatpush1.msra.mxu0 %v52
    %79 = vmatprep.subr.mxu0 0.0
    %80 = vmatpush1.msra.mxu0 %v51
    %81 = vmatprep.subr.mxu0 0.0
    %82 = vmatpush1.msra.mxu0 %v50
    %83 = vmatprep.subr.mxu0 0.0
    %84 = vmatpush1.msra.mxu0 %v49
    %85 = vmatprep.subr.mxu0 0.0
    %86 = vmatpush1.msra.mxu0 %v48
    %87 = vmatprep.subr.mxu0 0.0
    %88 = vmatpush1.msra.mxu0 %v47
    %89 = vmatprep.subr.mxu0 0.0
    %90 = vmatpush1.msra.mxu0 %v46
    %91 = vmatprep.subr.mxu0 0.0
    %92 = vmatpush1.msra.mxu0 %v45
    %93 = vmatprep.subr.mxu0 0.0
    %94 = vmatpush2.msra.mxu0 0.0
    %95 = vmatprep.subr.mxu0 0.0
    %96 = vmatpush2.msra.mxu0 0.0
    %97 = vmatprep.subr.mxu0 0.0
    %98 = vmatpush2.msra.mxu0 0.0
    %99 = vmatprep.subr.mxu0 0.0
    %100 = vmatpush2.msra.mxu0 0.0
    %101 = vmatprep.subr.mxu0 0.0
    %102 = vmatpush2.msra.mxu0 0.0
    %103 = vmatprep.subr.mxu0 0.0
    %104 = vmatpush2.msra.mxu0 0.0
    %105 = vmatprep.subr.mxu0 0.0
    %106 = vmatpush2.msra.mxu0 0.0
    %107 = vmatprep.subr.mxu0 0.0
    %108 = vmatpush2.msra.mxu0 0.0
    %109 = vmatprep.subr.mxu0 0.0
    %110 = vmatpush2.msra.mxu0 0.0
    %111 = vmatprep.subr.mxu0 0.0
    %112 = vmatpush2.msra.mxu0 0.0
    %113 = vmatprep.subr.mxu0 0.0
    %114 = vmatpush2.msra.mxu0 0.0
    %115 = vmatprep.subr.mxu0 0.0
    %116 = vmatpush2.msra.mxu0 0.0
    %117 = vmatprep.subr.mxu0 0.0
    %118 = vmatpush2.msra.mxu0 0.0
    %119 = vmatprep.subr.mxu0 0.0
    %120 = vmatpush2.msra.mxu0 0.0
    %121 = vmatprep.subr.mxu0 0.0
    %122 = vmatpush2.msra.mxu0 0.0
    %123 = vmatprep.subr.mxu0 0.0
    %124 = vmatpush2.msra.mxu0 0.0
    %125 = vmatprep.mubr.f32.mxu0 0.0
    %126 = vmatmul.mubr.f32.gmra.mxu0 %v44
    %v127 = vpop.f32.mrf.mxu0
    %v128 = vadd.f32 0.0, %v127
    %v129 = vpop.f32.mrf.mxu0
    %130 = vdwg.mxu0
    %v131 = vld [vmem:[%s2] sm:$0x1]
    %v132 = vld [vmem:[%s3] sm:$0x1]
    %v133 = vrot.slane %v128, 4
    %v134 = vadd.f32 %v128, %v133
    %v135 = vrot.slane %v134, 2
    %v136 = vadd.f32 %v134, %v135
    %v137 = vrot.slane %v136, 1
    %v138 = vadd.f32 %v136, %v137
    %v139 = vmul.f32 %v138, 0.125
    %v140 = vmul.f32 %v128, %v128
    %v141 = vrot.slane %v140, 4
    %v142 = vadd.f32 %v140, %v141
    %v143 = vrot.slane %v142, 2
    %v144 = vadd.f32 %v142, %v143
    %v145 = vrot.slane %v144, 1
    %v146 = vadd.f32 %v144, %v145
    %v147 = vmul.f32 %v146, 0.125
    %v148 = vmul.f32 %v139, %v139
    %v149 = vsub.f32 %v147, %v148
    %v150 = vmax.f32 %v149, 0.0
    %v151 = vadd.f32 %v150, 1e-05
    %v152 = vrsqrt.pop %v151
    %v153 = vmul.f32 %v131, %v152
    %v154 = vmul.f32 %v139, %v153
    %v155 = vsub.f32 %v132, %v154
    %v157 = vlaneseq
    %v158 = vshrl.u32 %v157, 7
    %v159 = vsub.s32 0, %v158
    %v160 = vrot.slane %v153, %v159
    %v162 = vmul.f32 %v128, %v160
    %v164 = vlaneseq
    %v165 = vshrl.u32 %v164, 7
    %v166 = vsub.s32 0, %v165
    %v167 = vrot.slane %v155, %v166
    %v169 = vadd.f32 %v162, %v167
    %v170 = vsub.f32 0.0, %v169
    %v171 = vmul.f32 %v170, 1.442695
    %v172 = vpow.pop %v171
    %v173 = vadd.f32 %v172, 1.0
    %v174 = vrcp.pop %v173
    %v175 = vmul.f32 %v169, %v174
    %176 = vst [vmem:[#allocation7] sm:$0xff] %v175
    // Predicated region
    $region26: #{tpu_custom_call.1} parent=1 // pred_check
      _
    $region27: #{tpu_custom_call.1} parent=1 // pred_check_branch
      %178 = sbr.rel (0) target = $region29
    $region28: #{tpu_custom_call.1} parent=1 // pred_region
      %s180 = ssub.s32 128, 128
      %181 = vsyncadd [#allocation4], %s180
      %s183 = sshll.u32 [#allocation7], 4
      %s184 = int_to_ptr.vmem [resolvable:$true] %s183
      %186 = dma.vmem_to_hbm [thread:$0]  %s184, 128, %s4, [#allocation4]
    $region29: #{tpu_custom_call.1} parent=1 // pred_fallthru
      _
    // Predicated region
    $region30: #{tpu_custom_call.1} parent=1 // pred_check
      _
    $region31: #{tpu_custom_call.1} parent=1 // pred_check_branch
      %188 = sbr.rel (0) target = $region33
    $region32: #{tpu_custom_call.1} parent=1 // pred_region
      %189 = dma.done [#allocation4], 128
    $region33: #{tpu_custom_call.1} parent=1 // pred_fallthru
      _
    %190 = vsyncpa [#allocation3], 1
    %191 = vsyncpa [#allocation6], 1
    %192 = vsyncpa [#allocation4], 1

</llo_original>
